<compile_context>
chip_gen: v7x
topology: tpu7x:2x2x1
jax: 0.10.0
libtpu: 0.0.40
codegen_flags: <defaults>
</compile_context>

<pallas_src>
import functools

import jax
import jax.numpy as jnp
from jax import lax
from jax.experimental import pallas as pl
from jax.experimental.pallas import tpu as pltpu


def _contrastive_kernel(im_i_ref, s_j_ref, s_i_ref, im_j_ref, out_ref, *,
                        margin, tm):
    i = pl.program_id(0)   # row-tile index of im  (rows of the score matrix)
    j = pl.program_id(1)   # row-tile index of s   (cols of the score matrix)

    @pl.when((i == 0) & (j == 0))
    def _init():
        out_ref[0, 0] = jnp.float32(0.0)

    im_i = im_i_ref[...]                       # (TM, D), original dtype
    s_j = s_j_ref[...]                         # (TM, D), original dtype

    # Score block on the MXU: contract the last (lane) dim of both operands,
    # f32 accumulation. No explicit `s.T` is formed.
    scores = lax.dot_general(
        im_i, s_j,
        dimension_numbers=(((1,), (1,)), ((), ())),
        preferred_element_type=jnp.float32)    # (TM, TM) f32

    # Diagonal entries (never pulled out of `scores`):
    #   d1[r] = im[i*TM+r] . s[i*TM+r]  -> column vector, broadcast over cols
    #   d2[c] = im[j*TM+c] . s[j*TM+c]  -> row vector,    broadcast over rows
    prod_i = im_i.astype(jnp.float32) * s_i_ref[...].astype(jnp.float32)
    d1 = jnp.sum(prod_i, axis=1, keepdims=True)                      # (TM, 1)

    prod_j = im_j_ref[...].astype(jnp.float32) * s_j.astype(jnp.float32)
    # ones-vector matmul == row-wise reduce that lands directly in (1, TM)
    # lane layout, avoiding a (TM,1)->(1,TM) relayout.
    d2 = lax.dot_general(
        jnp.ones((1, prod_j.shape[1]), jnp.float32), prod_j,
        dimension_numbers=(((1,), (1,)), ((), ())),
        preferred_element_type=jnp.float32)                          # (1, TM)

    # Fused epilogue: one base, cost_s + cost_im, one mask, one reduction.
    base = scores + jnp.float32(margin)
    cost = jnp.maximum(base - d1, 0.0) + jnp.maximum(base - d2, 0.0)

    r_idx = lax.broadcasted_iota(jnp.int32, (tm, tm), 0) + i * tm
    c_idx = lax.broadcasted_iota(jnp.int32, (tm, tm), 1) + j * tm
    cost = jnp.where(r_idx == c_idx, 0.0, cost)   # zero the global diagonal

    out_ref[0, 0] += jnp.sum(cost)


def contrastive_loss(im, s, margin=0.0, block_rows=256):
    """im: (N, D) image embeddings, s: (N, D) sentence embeddings -> f32 loss."""
    n, d = im.shape
    assert s.shape == (n, d)

    if n <= block_rows:
        tm = n                        # single block covers the whole problem
    else:
        tm = block_rows               # keeps second-to-last block dim 8-aligned
        assert n % tm == 0, "N must be a multiple of block_rows"
        # TODO(synk): pad / mask a ragged final tile for N % block_rows != 0.
    grid = (n // tm, n // tm)

    kernel = functools.partial(_contrastive_kernel, margin=float(margin), tm=tm)

    out = pl.pallas_call(
        kernel,
        out_shape=jax.ShapeDtypeStruct((1, 1), jnp.float32),
        grid=grid,
        in_specs=[
            pl.BlockSpec((tm, d), lambda i, j: (i, 0)),  # im rows of block-row i
            pl.BlockSpec((tm, d), lambda i, j: (j, 0)),  # s  rows of block-col j
            pl.BlockSpec((tm, d), lambda i, j: (i, 0)),  # s  rows aligned w/ im rows (d1)
            pl.BlockSpec((tm, d), lambda i, j: (j, 0)),  # im rows aligned w/ s cols (d2)
        ],
        # scalar result lives in SMEM and stays resident across the whole grid
        out_specs=pl.BlockSpec(memory_space=pltpu.MemorySpace.SMEM),
        compiler_params=pltpu.CompilerParams(
            # the scalar output accumulates over both grid axes -> both arbitrary
            dimension_semantics=("arbitrary", "arbitrary")),
    )(im, s, s, im)
    return out[0, 0]


def _reference_loss(im, s, margin=0.0):
    scores = im.astype(jnp.float32) @ s.astype(jnp.float32).T
    diag = jnp.diag(scores)
    d1 = diag[:, None]
    d2 = diag[None, :]
    eye = jnp.eye(scores.shape[0], dtype=bool)
    cost_s = jnp.where(eye, 0.0, jnp.maximum(margin + scores - d1, 0.0))
    cost_im = jnp.where(eye, 0.0, jnp.maximum(margin + scores - d2, 0.0))
    return jnp.sum(cost_s) + jnp.sum(cost_im)


if __name__ == "__main__":
    key = jax.random.PRNGKey(0)
    k_im, k_s = jax.random.split(key)
    N, D = 8, 32  # batch of 8 image/sentence embeddings, hidden dim 32
    im = jax.random.normal(k_im, (N, D), dtype=jnp.float32)
    s = jax.random.normal(k_s, (N, D), dtype=jnp.float32)

    loss = jax.jit(contrastive_loss)(im, s)
    loss = jax.block_until_ready(loss)

    ref = _reference_loss(im, s)
    assert jnp.allclose(loss, ref, rtol=1e-4, atol=1e-3), (loss, ref)

    print("KERNEL_OK")
</pallas_src>

<mosaic_0001>
module attributes {stable_mosaic.version = 11 : i64} {
  func.func @_contrastive_kernel(%arg0: i32, %arg1: i32, %arg2: memref<8x32xf32, #tpu.memory_space<vmem>>, %arg3: memref<8x32xf32, #tpu.memory_space<vmem>>, %arg4: memref<8x32xf32, #tpu.memory_space<vmem>>, %arg5: memref<8x32xf32, #tpu.memory_space<vmem>>, %arg6: memref<1x1xf32, #tpu.memory_space<smem>>) attributes {dimension_semantics = [#tpu.dimension_semantics<arbitrary>, #tpu.dimension_semantics<arbitrary>], iteration_bounds = array<i64: 1, 1>, scalar_prefetch = 0 : i64, scratch_operands = 0 : i64, tpu.core_type = #tpu.core_type<tc>, window_params = [{transform_indices = @transform_0, window_bounds = array<i64: 8, 32>}, {transform_indices = @transform_1, window_bounds = array<i64: 8, 32>}, {transform_indices = @transform_2, window_bounds = array<i64: 8, 32>}, {transform_indices = @transform_3, window_bounds = array<i64: 8, 32>}, {transform_indices = @transform_4, window_bounds = array<i64: 1, 1>}]} {
    %c0_i32 = arith.constant 0 : i32
    %0 = arith.cmpi eq, %arg0, %c0_i32 : i32
    %c0_i32_0 = arith.constant 0 : i32
    %1 = arith.cmpi eq, %arg1, %c0_i32_0 : i32
    %2 = arith.andi %0, %1 : i1
    %3 = arith.extui %2 : i1 to i32
    %c0_i32_1 = arith.constant 0 : i32
    %4 = arith.cmpi ne, %3, %c0_i32_1 : i32
    scf.if %4 {
      %cst_22 = arith.constant 0.000000e+00 : f32
      %c0_23 = arith.constant 0 : index
      %c0_24 = arith.constant 0 : index
      %45 = memref.load %arg6[%c0_23, %c0_24] : memref<1x1xf32, #tpu.memory_space<smem>>
      memref.store %cst_22, %arg6[%c0_23, %c0_24] : memref<1x1xf32, #tpu.memory_space<smem>>
    } else {
    }
    %c0 = arith.constant 0 : index
    %c0_2 = arith.constant 0 : index
    %5 = vector.load %arg2[%c0, %c0_2] : memref<8x32xf32, #tpu.memory_space<vmem>>, vector<8x32xf32>
    %c0_3 = arith.constant 0 : index
    %c0_4 = arith.constant 0 : index
    %6 = vector.load %arg3[%c0_3, %c0_4] : memref<8x32xf32, #tpu.memory_space<vmem>>, vector<8x32xf32>
    %cst = arith.constant dense<0.000000e+00> : vector<8x8xf32>
    %7 = tpu.matmul %5, %6, %cst {dimension_numbers = #tpu.dot_dimension_numbers<[1], [1], [0], [0], [0, 0, 1, 0], [], []>} : vector<8x32xf32>, vector<8x32xf32>, vector<8x8xf32> -> vector<8x8xf32>
    %c0_5 = arith.constant 0 : index
    %c0_6 = arith.constant 0 : index
    %8 = vector.load %arg4[%c0_5, %c0_6] : memref<8x32xf32, #tpu.memory_space<vmem>>, vector<8x32xf32>
    %9 = arith.mulf %5, %8 : vector<8x32xf32>
    %cst_7 = arith.constant dense<0.000000e+00> : vector<8xf32>
    %10 = vector.multi_reduction <add>, %9, %cst_7 [1] : vector<8x32xf32> to vector<8xf32>
    %11 = vector.shape_cast %10 : vector<8xf32> to vector<8x1xf32>
    %c0_8 = arith.constant 0 : index
    %c0_9 = arith.constant 0 : index
    %12 = vector.load %arg5[%c0_8, %c0_9] : memref<8x32xf32, #tpu.memory_space<vmem>>, vector<8x32xf32>
    %13 = arith.mulf %12, %6 : vector<8x32xf32>
    %cst_10 = arith.constant 1.000000e+00 : f32
    %14 = vector.broadcast %cst_10 : f32 to vector<1x32xf32>
    %cst_11 = arith.constant dense<0.000000e+00> : vector<1x8xf32>
    %15 = tpu.matmul %14, %13, %cst_11 {dimension_numbers = #tpu.dot_dimension_numbers<[1], [1], [0], [0], [0, 0, 1, 0], [], []>} : vector<1x32xf32>, vector<8x32xf32>, vector<1x8xf32> -> vector<1x8xf32>
    %cst_12 = arith.constant 0.000000e+00 : f32
    %16 = vector.broadcast %cst_12 : f32 to vector<8x8xf32>
    %17 = arith.addf %7, %16 : vector<8x8xf32>
    %18 = vector.broadcast %11 : vector<8x1xf32> to vector<8x8xf32>
    %19 = arith.subf %17, %18 : vector<8x8xf32>
    %cst_13 = arith.constant 0.000000e+00 : f32
    %20 = vector.broadcast %cst_13 : f32 to vector<8x8xf32>
    %21 = arith.maximumf %19, %20 : vector<8x8xf32>
    %22 = vector.broadcast %15 : vector<1x8xf32> to vector<8x8xf32>
    %23 = arith.subf %17, %22 : vector<8x8xf32>
    %cst_14 = arith.constant 0.000000e+00 : f32
    %24 = vector.broadcast %cst_14 : f32 to vector<8x8xf32>
    %25 = arith.maximumf %23, %24 : vector<8x8xf32>
    %26 = arith.addf %21, %25 : vector<8x8xf32>
    %27 = tpu.iota {dimensions = array<i32: 0>} : vector<8x8xi32>
    %c8_i32 = arith.constant 8 : i32
    %28 = arith.muli %arg0, %c8_i32 : i32
    %29 = vector.broadcast %28 : i32 to vector<8x8xi32>
    %30 = arith.addi %27, %29 : vector<8x8xi32>
    %31 = tpu.iota {dimensions = array<i32: 1>} : vector<8x8xi32>
    %c8_i32_15 = arith.constant 8 : i32
    %32 = arith.muli %arg1, %c8_i32_15 : i32
    %33 = vector.broadcast %32 : i32 to vector<8x8xi32>
    %34 = arith.addi %31, %33 : vector<8x8xi32>
    %35 = arith.cmpi eq, %30, %34 : vector<8x8xi32>
    %cst_16 = arith.constant 0.000000e+00 : f32
    %36 = vector.broadcast %cst_16 : f32 to vector<8x8xf32>
    %37 = arith.select %35, %36, %26 : vector<8x8xi1>, vector<8x8xf32>
    %c0_17 = arith.constant 0 : index
    %c0_18 = arith.constant 0 : index
    %38 = memref.load %arg6[%c0_17, %c0_18] : memref<1x1xf32, #tpu.memory_space<smem>>
    %39 = vector.shape_cast %37 : vector<8x8xf32> to vector<1x8x8xf32>
    %cst_19 = arith.constant dense<0.000000e+00> : vector<1xf32>
    %40 = vector.multi_reduction <add>, %39, %cst_19 [1, 2] : vector<1x8x8xf32> to vector<1xf32>
    %41 = vector.shape_cast %40 : vector<1xf32> to vector<1x1x1xf32>
    %42 = vector.extract %41[0, 0, 0] : f32 from vector<1x1x1xf32>
    %43 = arith.addf %38, %42 : f32
    %c0_20 = arith.constant 0 : index
    %c0_21 = arith.constant 0 : index
    %44 = memref.load %arg6[%c0_20, %c0_21] : memref<1x1xf32, #tpu.memory_space<smem>>
    memref.store %43, %arg6[%c0_20, %c0_21] : memref<1x1xf32, #tpu.memory_space<smem>>
    return
  }
  func.func @transform_0(%arg0: i32, %arg1: i32) -> (i32, i32) {
    %c0_i32 = arith.constant 0 : i32
    %c0_i32_0 = arith.constant 0 : i32
    return %arg0, %c0_i32 : i32, i32
  }
  func.func @transform_1(%arg0: i32, %arg1: i32) -> (i32, i32) {
    %c0_i32 = arith.constant 0 : i32
    %c0_i32_0 = arith.constant 0 : i32
    return %arg1, %c0_i32 : i32, i32
  }
  func.func @transform_2(%arg0: i32, %arg1: i32) -> (i32, i32) {
    %c0_i32 = arith.constant 0 : i32
    %c0_i32_0 = arith.constant 0 : i32
    return %arg0, %c0_i32 : i32, i32
  }
  func.func @transform_3(%arg0: i32, %arg1: i32) -> (i32, i32) {
    %c0_i32 = arith.constant 0 : i32
    %c0_i32_0 = arith.constant 0 : i32
    return %arg1, %c0_i32 : i32, i32
  }
  func.func @transform_4(%arg0: i32, %arg1: i32) -> (i32, i32) {
    %c0_i32 = arith.constant 0 : i32
    %c0_i32_0 = arith.constant 0 : i32
    %c0_i32_1 = arith.constant 0 : i32
    return %c0_i32, %c0_i32_0 : i32, i32
  }
}

</mosaic_0001>

<llo_original>
// kernel: contrastive_loss.1
$region0: #{contrastive_loss.1}
  #allocation0 [shape = 'u32[]', space=smem, size = 0x4, offset = 0x4, fixed_abs, tag = 'smem constant byte address 0x4 - core index']
  #allocation1 [shape = 'u32[144,128]{1,0:T(1,128)}', space=vmem, size = 0x12000, scoped, tag = 'internal scratch']
  %s0 = inlined_call_operand.hbm [shape: f32[8,32], index: 0, kind: input, shape index: {}, may-alias: {0,3}]
  %s1 = inlined_call_operand.hbm [shape: f32[8,32], index: 1, kind: input, shape index: {}, may-alias: {1,2}]
  %s2 = inlined_call_operand.hbm [shape: f32[8,32], index: 2, kind: input, shape index: {}, may-alias: {1,2}]
  %s3 = inlined_call_operand.hbm [shape: f32[8,32], index: 3, kind: input, shape index: {}, may-alias: {0,3}]
  %s4 = inlined_call_operand.hbm [shape: f32[1,1], index: 4, kind: output, shape index: {}]
  %s5 = sld [smem:[#allocation0]]
  $region46: #{contrastive_loss.1} parent=0
    _
  %s7 = ssub.s32 1, %s5
  %s8 = scalar_select 0, %s7, %s5
  $region1: #{contrastive_loss.1} parent=0
    #allocation2 [shape = 'u8[4096]{0}', space=vmem, size = 0x1000, scoped, tag = 'input window, operand 0, single buffered']
    #allocation3 [shape = 's32[1]{0}', space=sflag, size = 0x4, scoped, tag = 'scoped memory for contrastive_loss.1']
    #allocation4 [shape = 's32[1]{0}', space=sflag, size = 0x4, scoped, tag = 'scoped memory for contrastive_loss.1']
    #allocation5 [shape = 'u8[4096]{0}', space=vmem, size = 0x1000, scoped, tag = 'input window, operand 1, single buffered']
    #allocation6 [shape = 's32[1]{0}', space=sflag, size = 0x4, scoped, tag = 'scoped memory for contrastive_loss.1']
    #allocation7 [shape = 'u8[4096]{0}', space=vmem, size = 0x1000, scoped, tag = 'input window, operand 2, single buffered']
    #allocation8 [shape = 'u8[4096]{0}', space=vmem, size = 0x1000, scoped, tag = 'input window, operand 3, single buffered']
    #allocation9 [shape = 's32[1]{0}', space=sflag, size = 0x4, scoped, tag = 'scoped memory for contrastive_loss.1']
    #allocation10 [shape = 'u8[512]{0}', space=smem, size = 0x200, scoped, tag = 'output window, operand 0, single buffered']
    %9 = vsyncpa [#allocation3], 0
    %10 = vsyncpa [#allocation6], 0
    %11 = vsyncpa [#allocation9], 0
    %12 = vsyncpa [#allocation4], 0
    // Predicated region
    $region2: #{contrastive_loss.1} parent=1 // pred_check
      _
    $region3: #{contrastive_loss.1} parent=1 // pred_check_branch
      %14 = sbr.rel (0) target = $region5
    $region4: #{contrastive_loss.1} parent=1 // pred_region
      %s16 = ssub.s32 128, 128
      %17 = vsyncadd [#allocation3], %s16
      %s19 = sshll.u32 [#allocation2], 4
      %s20 = int_to_ptr.vmem [resolvable:$true] %s19
      %22 = dma.hbm_to_vmem [thread:$0]  %s0, 128, %s20, [#allocation3]
    $region5: #{contrastive_loss.1} parent=1 // pred_fallthru
      _
    // Predicated region
    $region6: #{contrastive_loss.1} parent=1 // pred_check
      _
    $region7: #{contrastive_loss.1} parent=1 // pred_check_branch
      %24 = sbr.rel (0) target = $region9
    $region8: #{contrastive_loss.1} parent=1 // pred_region
      %s26 = ssub.s32 128, 128
      %27 = vsyncadd [#allocation6], %s26
      %s29 = sshll.u32 [#allocation5], 4
      %s30 = int_to_ptr.vmem [resolvable:$true] %s29
      %32 = dma.hbm_to_vmem [thread:$0]  %s1, 128, %s30, [#allocation6]
    $region9: #{contrastive_loss.1} parent=1 // pred_fallthru
      _
    // Predicated region
    $region10: #{contrastive_loss.1} parent=1 // pred_check
      _
    $region11: #{contrastive_loss.1} parent=1 // pred_check_branch
      %34 = sbr.rel (0) target = $region13
    $region12: #{contrastive_loss.1} parent=1 // pred_region
      %s36 = ssub.s32 128, 128
      %37 = vsyncadd [#allocation6], %s36
      %s39 = sshll.u32 [#allocation7], 4
      %s40 = int_to_ptr.vmem [resolvable:$true] %s39
      %42 = dma.hbm_to_vmem [thread:$0]  %s2, 128, %s40, [#allocation6]
    $region13: #{contrastive_loss.1} parent=1 // pred_fallthru
      _
    // Predicated region
    $region14: #{contrastive_loss.1} parent=1 // pred_check
      _
    $region15: #{contrastive_loss.1} parent=1 // pred_check_branch
      %44 = sbr.rel (0) target = $region17
    $region16: #{contrastive_loss.1} parent=1 // pred_region
      %s46 = ssub.s32 128, 128
      %47 = vsyncadd [#allocation9], %s46
      %s49 = sshll.u32 [#allocation8], 4
      %s50 = int_to_ptr.vmem [resolvable:$true] %s49
      %52 = dma.hbm_to_vmem [thread:$0]  %s3, 128, %s50, [#allocation9]
    $region17: #{contrastive_loss.1} parent=1 // pred_fallthru
      _
    // Predicated region
    $region18: #{contrastive_loss.1} parent=1 // pred_check
      _
    $region19: #{contrastive_loss.1} parent=1 // pred_check_branch
      %54 = sbr.rel (0) target = $region21
    $region20: #{contrastive_loss.1} parent=1 // pred_region
      %55 = dma.done [#allocation3], 128
    $region21: #{contrastive_loss.1} parent=1 // pred_fallthru
      _
    // Predicated region
    $region22: #{contrastive_loss.1} parent=1 // pred_check
      _
    $region23: #{contrastive_loss.1} parent=1 // pred_check_branch
      %57 = sbr.rel (0) target = $region25
    $region24: #{contrastive_loss.1} parent=1 // pred_region
      %58 = dma.done [#allocation6], 128
    $region25: #{contrastive_loss.1} parent=1 // pred_fallthru
      _
    // Predicated region
    $region26: #{contrastive_loss.1} parent=1 // pred_check
      _
    $region27: #{contrastive_loss.1} parent=1 // pred_check_branch
      %60 = sbr.rel (0) target = $region29
    $region28: #{contrastive_loss.1} parent=1 // pred_region
      %61 = dma.done [#allocation6], 128
    $region29: #{contrastive_loss.1} parent=1 // pred_fallthru
      _
    // Predicated region
    $region30: #{contrastive_loss.1} parent=1 // pred_check
      _
    $region31: #{contrastive_loss.1} parent=1 // pred_check_branch
      %63 = sbr.rel (0) target = $region33
    $region32: #{contrastive_loss.1} parent=1 // pred_region
      %64 = dma.done [#allocation9], 128
    $region33: #{contrastive_loss.1} parent=1 // pred_fallthru
      _
    %p65 = scmp.eq.s32.totalorder 0, 0
    %p66 = scmp.eq.s32.totalorder 0, 0
    %p67 = pnand %p65, %p66
    %p68 = pneg %p67
    // Predicated region
    $region34: #{contrastive_loss.1} parent=1 // pred_check
      _
    $region35: #{contrastive_loss.1} parent=1 // pred_check_branch
      %70 = sbr.rel (%p67) target = $region37
    $region36: #{contrastive_loss.1} parent=1 // pred_region
      %s71 = scalar_lea.smem [#allocation10], 0
      %72 = sst [smem:[%s71]] 0.0
    $region37: #{contrastive_loss.1} parent=1 // pred_fallthru
      _
    %v73 = vld [vmem:[#allocation2] sm:$0xff]
    %v74 = vld [vmem:[#allocation5] sm:$0xff]
    %v75 = vld [vmem:[#allocation7] sm:$0xff]
    %v76 = vmul.f32 %v73, %v75
    %vm77 = vcmask 261120
    %v78 = vsel %vm77, %v76, 0.0
    %79 = vadd.xlane.f32.xlu0 %v78
    %v80 = vpop.xlane.xlu0 %79
    %v81 = vld [vmem:[#allocation8] sm:$0xff]
    %v82 = vmul.f32 %v81, %v74
    %v84 = vsel %vm77, 1.0, 0
    %v87 = vsel %vm77, %v82, 0
    %89 = vmatprep.subr.mxu0 0.0
    %90 = vmatpush1.xpose.msra.mxu0 %v87
    %91 = vmatprep.subr.mxu0 0.0
    %92 = vmatpush1.xpose.msra.mxu0 0.0
    %93 = vmatprep.subr.mxu0 0.0
    %94 = vmatpush1.xpose.msra.mxu0 0.0
    %95 = vmatprep.subr.mxu0 0.0
    %96 = vmatpush1.xpose.msra.mxu0 0.0
    %97 = vmatprep.subr.mxu0 0.0
    %98 = vmatpush1.xpose.msra.mxu0 0.0
    %99 = vmatprep.subr.mxu0 0.0
    %100 = vmatpush1.xpose.msra.mxu0 0.0
    %101 = vmatprep.subr.mxu0 0.0
    %102 = vmatpush1.xpose.msra.mxu0 0.0
    %103 = vmatprep.subr.mxu0 0.0
    %104 = vmatpush1.xpose.msra.mxu0 0.0
    %105 = vmatprep.subr.mxu0 0.0
    %106 = vmatpush1.xpose.msra.mxu0 0.0
    %107 = vmatprep.subr.mxu0 0.0
    %108 = vmatpush1.xpose.msra.mxu0 0.0
    %109 = vmatprep.subr.mxu0 0.0
    %110 = vmatpush1.xpose.msra.mxu0 0.0
    %111 = vmatprep.subr.mxu0 0.0
    %112 = vmatpush1.xpose.msra.mxu0 0.0
    %113 = vmatprep.subr.mxu0 0.0
    %114 = vmatpush1.xpose.msra.mxu0 0.0
    %115 = vmatprep.subr.mxu0 0.0
    %116 = vmatpush1.xpose.msra.mxu0 0.0
    %117 = vmatprep.subr.mxu0 0.0
    %118 = vmatpush1.xpose.msra.mxu0 0.0
    %119 = vmatprep.subr.mxu0 0.0
    %120 = vmatpush1.xpose.msra.mxu0 0.0
    %121 = vmatprep.subr.mxu0 0.0
    %122 = vmatpush1.xpose.msra.mxu0 0.0
    %123 = vmatprep.subr.mxu0 0.0
    %124 = vmatpush1.xpose.msra.mxu0 0.0
    %125 = vmatprep.subr.mxu0 0.0
    %126 = vmatpush1.xpose.msra.mxu0 0.0
    %127 = vmatprep.subr.mxu0 0.0
    %128 = vmatpush1.xpose.msra.mxu0 0.0
    %129 = vmatprep.subr.mxu0 0.0
    %130 = vmatpush1.xpose.msra.mxu0 0.0
    %131 = vmatprep.subr.mxu0 0.0
    %132 = vmatpush1.xpose.msra.mxu0 0.0
    %133 = vmatprep.subr.mxu0 0.0
    %134 = vmatpush1.xpose.msra.mxu0 0.0
    %135 = vmatprep.subr.mxu0 0.0
    %136 = vmatpush1.xpose.msra.mxu0 0.0
    %137 = vmatprep.subr.mxu0 0.0
    %138 = vmatpush1.xpose.msra.mxu0 0.0
    %139 = vmatprep.subr.mxu0 0.0
    %140 = vmatpush1.xpose.msra.mxu0 0.0
    %141 = vmatprep.subr.mxu0 0.0
    %142 = vmatpush1.xpose.msra.mxu0 0.0
    %143 = vmatprep.subr.mxu0 0.0
    %144 = vmatpush1.xpose.msra.mxu0 0.0
    %145 = vmatprep.subr.mxu0 0.0
    %146 = vmatpush1.xpose.msra.mxu0 0.0
    %147 = vmatprep.subr.mxu0 0.0
    %148 = vmatpush1.xpose.msra.mxu0 0.0
    %149 = vmatprep.subr.mxu0 0.0
    %150 = vmatpush1.xpose.msra.mxu0 0.0
    %151 = vmatprep.subr.mxu0 0.0
    %152 = vmatpush1.xpose.msra.mxu0 0.0
    %153 = vmatprep.mubr.f32.mxu0 0.0
    %154 = vmatmul.mubr.f32.gmra.mrb[0].mxu0 %v84
    %v155 = vpop.f32.mrb[0].mxu0
    %v156 = vadd.f32 0.0, %v155
    %v157 = vpop.f32.mrb[0].mxu0
    %158 = vdwg.mxu0
    %v160 = vsel %vm77, %v73, 0
    %v163 = vsel %vm77, %v74, 0
    %165 = vmatprep.subr.mxu0 0.0
    %166 = vmatpush1.xpose.msra.mxu0 %v163
    %167 = vmatprep.subr.mxu0 0.0
    %168 = vmatpush1.xpose.msra.mxu0 0.0
    %169 = vmatprep.subr.mxu0 0.0
    %170 = vmatpush1.xpose.msra.mxu0 0.0
    %171 = vmatprep.subr.mxu0 0.0
    %172 = vmatpush1.xpose.msra.mxu0 0.0
    %173 = vmatprep.subr.mxu0 0.0
    %174 = vmatpush1.xpose.msra.mxu0 0.0
    %175 = vmatprep.subr.mxu0 0.0
    %176 = vmatpush1.xpose.msra.mxu0 0.0
    %177 = vmatprep.subr.mxu0 0.0
    %178 = vmatpush1.xpose.msra.mxu0 0.0
    %179 = vmatprep.subr.mxu0 0.0
    %180 = vmatpush1.xpose.msra.mxu0 0.0
    %181 = vmatprep.subr.mxu0 0.0
    %182 = vmatpush1.xpose.msra.mxu0 0.0
    %183 = vmatprep.subr.mxu0 0.0
    %184 = vmatpush1.xpose.msra.mxu0 0.0
    %185 = vmatprep.subr.mxu0 0.0
    %186 = vmatpush1.xpose.msra.mxu0 0.0
    %187 = vmatprep.subr.mxu0 0.0
    %188 = vmatpush1.xpose.msra.mxu0 0.0
    %189 = vmatprep.subr.mxu0 0.0
    %190 = vmatpush1.xpose.msra.mxu0 0.0
    %191 = vmatprep.subr.mxu0 0.0
    %192 = vmatpush1.xpose.msra.mxu0 0.0
    %193 = vmatprep.subr.mxu0 0.0
    %194 = vmatpush1.xpose.msra.mxu0 0.0
    %195 = vmatprep.subr.mxu0 0.0
    %196 = vmatpush1.xpose.msra.mxu0 0.0
    %197 = vmatprep.subr.mxu0 0.0
    %198 = vmatpush1.xpose.msra.mxu0 0.0
    %199 = vmatprep.subr.mxu0 0.0
    %200 = vmatpush1.xpose.msra.mxu0 0.0
    %201 = vmatprep.subr.mxu0 0.0
    %202 = vmatpush1.xpose.msra.mxu0 0.0
    %203 = vmatprep.subr.mxu0 0.0
    %204 = vmatpush1.xpose.msra.mxu0 0.0
    %205 = vmatprep.subr.mxu0 0.0
    %206 = vmatpush1.xpose.msra.mxu0 0.0
    %207 = vmatprep.subr.mxu0 0.0
    %208 = vmatpush1.xpose.msra.mxu0 0.0
    %209 = vmatprep.subr.mxu0 0.0
    %210 = vmatpush1.xpose.msra.mxu0 0.0
    %211 = vmatprep.subr.mxu0 0.0
    %212 = vmatpush1.xpose.msra.mxu0 0.0
    %213 = vmatprep.subr.mxu0 0.0
    %214 = vmatpush1.xpose.msra.mxu0 0.0
    %215 = vmatprep.subr.mxu0 0.0
    %216 = vmatpush1.xpose.msra.mxu0 0.0
    %217 = vmatprep.subr.mxu0 0.0
    %218 = vmatpush1.xpose.msra.mxu0 0.0
    %219 = vmatprep.subr.mxu0 0.0
    %220 = vmatpush1.xpose.msra.mxu0 0.0
    %221 = vmatprep.subr.mxu0 0.0
    %222 = vmatpush1.xpose.msra.mxu0 0.0
    %223 = vmatprep.subr.mxu0 0.0
    %224 = vmatpush1.xpose.msra.mxu0 0.0
    %225 = vmatprep.subr.mxu0 0.0
    %226 = vmatpush1.xpose.msra.mxu0 0.0
    %227 = vmatprep.subr.mxu0 0.0
    %228 = vmatpush1.xpose.msra.mxu0 0.0
    %229 = vmatprep.mubr.f32.mxu0 0.0
    %230 = vmatmul.mubr.f32.gmra.mrb[0].mxu0 %v160
    %v231 = vpop.f32.mrb[0].mxu0
    %v232 = vadd.f32 0.0, %v231
    %v233 = vpop.f32.mrb[0].mxu0
    %234 = vdwg.mxu0
    %v235 = vsub.f32 %v232, %v80
    %v236 = vmax.f32 %v235, 0.0
    %v237 = vlaneseq
    %v238 = vshrl.u32 %v237, 7
    %v239 = vsub.s32 0, %v238
    %v240 = vrot.slane %v156, %v239
    %v241 = vsub.f32 %v232, %v240
    %v242 = vmax.f32 %v241, 0.0
    %v243 = vadd.f32 %v236, %v242
    %v244 = vlaneseq
    %v245 = vshrl.u32 %v244, 7
    %s246 = smul.u32 0, 8
    %v247 = vstv %s246
    %v248 = vadd.s32 %v245, %v247
    %v249 = vlaneseq
    %v250 = vand.u32 %v249, 127
    %s251 = smul.u32 0, 8
    %v252 = vstv %s251
    %v253 = vadd.s32 %v250, %v252
    %vm254 = vcmp.eq.s32.totalorder %v248, %v253
    %v255 = vsel %vm254, 0.0, %v243
    %s256 = sld [smem:[#allocation10]]
    %vm257 = vcmask 64512
    %v258 = vsel %vm257, %v255, 0.0
    %259 = vadd.xlane.f32.xlu0 %v258
    %v260 = vpop.xlane.xlu0 %259
    %v261 = vrot.slane %v260, 4
    %v262 = vadd.f32 %v260, %v261
    %v263 = vrot.slane %v262, 2
    %v264 = vadd.f32 %v262, %v263
    %v265 = vrot.slane %v264, 1
    %v266 = vadd.f32 %v264, %v265
    %s267 = vtos %v266
    %s268 = sadd.f32 %s256, %s267
    %s269 = scalar_lea.smem [#allocation10], 0
    %270 = sst [smem:[%s269]] %s268
    // Predicated region
    $region38: #{contrastive_loss.1} parent=1 // pred_check
      _
    $region39: #{contrastive_loss.1} parent=1 // pred_check_branch
      %272 = sbr.rel (0) target = $region41
    $region40: #{contrastive_loss.1} parent=1 // pred_region
      %s274 = ssub.s32 16, 16
      %275 = vsyncadd [#allocation4], %s274
      %278 = dma.smem_to_hbm [#allocation10], 16, %s4, [#allocation4]
    $region41: #{contrastive_loss.1} parent=1 // pred_fallthru
      _
    // Predicated region
    $region42: #{contrastive_loss.1} parent=1 // pred_check
      _
    $region43: #{contrastive_loss.1} parent=1 // pred_check_branch
      %280 = sbr.rel (0) target = $region45
    $region44: #{contrastive_loss.1} parent=1 // pred_region
      %281 = dma.done [#allocation4], 16
    $region45: #{contrastive_loss.1} parent=1 // pred_fallthru
      _
    %282 = sfence
    %283 = vsyncpa [#allocation3], 1
    %284 = vsyncpa [#allocation6], 1
    %285 = vsyncpa [#allocation9], 1
    %286 = vsyncpa [#allocation4], 1

</llo_original>
